<compile_context>
chip_gen: v7x
topology: tpu7x:2x2x1
jax: 0.10.0
libtpu: 0.0.40
codegen_flags: <defaults>
</compile_context>

<pallas_src>
import math
import functools

import numpy as np
import jax
import jax.numpy as jnp
from jax import lax
from jax.experimental import pallas as pl
from jax.experimental.pallas import tpu as pltpu


# ---------------------------------------------------------------------------
# small helpers
# ---------------------------------------------------------------------------

def _compiler_params(dims):
    """dimension_semantics + an explicit VMEM limit derived from the chip."""
    kwargs = dict(dimension_semantics=dims)
    try:
        cap = pltpu.get_tpu_info().vmem_capacity_bytes
        kwargs["vmem_limit_bytes"] = int(min(cap * 3 // 4, 100 * 2 ** 20))
    except Exception:
        pass  # fall back to the compiler default scoped-VMEM limit
    return pltpu.CompilerParams(**kwargs)


def _pick_tile(dim, target, align):
    """Largest divisor of `dim` that is <= target and a multiple of `align`;
    falls back to the full dimension (always a legal block shape)."""
    if dim <= target:
        return dim
    t = (target // align) * align
    while t >= align:
        if dim % t == 0:
            return t
        t -= align
    return dim


# ---------------------------------------------------------------------------
# Tiled linear kernel:  o = x @ w_t + b      (x, w_t already bf16)
# ---------------------------------------------------------------------------

def _linear_kernel(x_ref, w_ref, b_ref, o_ref, acc_ref):
    kk = pl.program_id(2)

    @pl.when(kk == 0)
    def _():
        acc_ref[...] = jnp.zeros_like(acc_ref)

    # bf16 MXU inputs, f32 accumulation (inputs are pre-cast in the wrapper).
    acc_ref[...] += jnp.dot(x_ref[...], w_ref[...],
                            preferred_element_type=jnp.float32)

    @pl.when(kk == pl.num_programs(2) - 1)
    def _():
        o_ref[...] = (acc_ref[...] + b_ref[...].astype(jnp.float32)).astype(o_ref.dtype)


def pallas_linear(x, w_t, b, *, out_dtype=jnp.float32,
                  tm_target=256, tn_target=256, tk_target=512):
    """x: (M, K), w_t: (K, N), b: (N,) -> (M, N) in out_dtype."""
    # Cast once at trace time (no-op when callers already pass bf16).
    if x.dtype != jnp.bfloat16:
        x = x.astype(jnp.bfloat16)
    if w_t.dtype != jnp.bfloat16:
        w_t = w_t.astype(jnp.bfloat16)

    M, K = x.shape
    K2, Nf = w_t.shape
    assert K == K2

    # bf16 packs 16 rows per sublane group -> 16-aligned row tiles.
    tm = _pick_tile(M, tm_target, 16)
    tn = _pick_tile(Nf, tn_target, 128)
    tk = _pick_tile(K, tk_target, 128)

    b2 = b.reshape(1, Nf).astype(jnp.float32)
    grid = (M // tm, Nf // tn, K // tk)

    cost = pl.CostEstimate(
        flops=2 * M * Nf * K,
        transcendentals=0,
        bytes_accessed=int(M * K * 2 + K * Nf * 2 + M * Nf * jnp.dtype(out_dtype).itemsize),
    )

    return pl.pallas_call(
        _linear_kernel,
        out_shape=jax.ShapeDtypeStruct((M, Nf), out_dtype),
        grid=grid,
        in_specs=[
            pl.BlockSpec((tm, tk), lambda i, j, kk: (i, kk)),
            pl.BlockSpec((tk, tn), lambda i, j, kk: (kk, j)),
            pl.BlockSpec((1, tn), lambda i, j, kk: (0, j)),
        ],
        out_specs=pl.BlockSpec((tm, tn), lambda i, j, kk: (i, j)),
        scratch_shapes=[pltpu.VMEM((tm, tn), jnp.float32)],
        compiler_params=_compiler_params(("parallel", "parallel", "arbitrary")),
        cost_estimate=cost,
    )(x, w_t, b2)


# ---------------------------------------------------------------------------
# Attention kernel: per (batch n, q-tile) block, all heads, full key axis.
# The packed qkv tensor (N, T, 3D) is passed twice: once blocked over q-tiles
# (for Q) and once full-sequence (for K/V, resident across q-tiles).
# ---------------------------------------------------------------------------

def _mha_kernel(*refs, num_heads, head_dim, embed_dim, use_mask, use_mult):
    qkv_q_ref, qkv_kv_ref = refs[0], refs[1]
    i = 2
    mask_ref = None
    mult_ref = None
    if use_mask:
        mask_ref = refs[i]; i += 1
    if use_mult:
        mult_ref = refs[i]; i += 1
    o_ref, w_ref = refs[i], refs[i + 1]

    qq = qkv_q_ref[0]                  # (TQ, 3D) bf16  (scale pre-folded into q rows)
    kv = qkv_kv_ref[0]                 # (T,  3D) bf16

    mask = mask_ref[...] if use_mask else None   # (TQ, T) f32
    mult = mult_ref[0] if use_mult else None     # (TQ, T) f32

    D = embed_dim
    for h in range(num_heads):         # static unroll over heads
        lo = h * head_dim
        hi = lo + head_dim
        qh = qq[:, lo:hi]
        kh = kv[:, D + lo:D + hi]
        vh = kv[:, 2 * D + lo:2 * D + hi]

        # logits[t, s] = <q_h[t], k_h[s]>  (scale already folded into q projection)
        s = lax.dot_general(qh, kh, (((1,), (1,)), ((), ())),
                            preferred_element_type=jnp.float32)
        if use_mask:
            s = s + mask

        m = jnp.max(s, axis=-1, keepdims=True)
        e = jnp.exp(s - m)
        if use_mult:
            # fused: softmax followed by multiplier renorm == (e*mult)/sum(e*mult)
            e = e * mult
        # exact reciprocal of the (TQ, 1) row sums so stored weights sum to 1
        p = e * (1.0 / jnp.sum(e, axis=-1, keepdims=True))

        w_ref[0, h] = p.astype(w_ref.dtype)

        oh = lax.dot_general(p.astype(vh.dtype), vh, (((1,), (0,)), ((), ())),
                             preferred_element_type=jnp.float32)
        # write the head's slab directly into the lane-dense output block
        o_ref[0, :, lo:hi] = oh.astype(o_ref.dtype)


def pallas_mha_attention(qkv, mask, mult, *, num_heads, embed_dim,
                         weights_dtype=jnp.float32):
    """qkv: (N, T, 3D) bf16 packed [q|k|v].  mask: optional (T, T).
    mult: optional (N, T, T).  Returns (o (N, T, D) bf16, weights (N, H, T, T))."""
    N, T, D3 = qkv.shape
    D = embed_dim
    H = num_heads
    hd = D // H
    assert D3 == 3 * D

    TQ = _pick_tile(T, 512, 16)        # bigger q-tiles amortize per-step overhead
    grid = (N, T // TQ)                # q-tile innermost -> K/V block stays resident

    use_mask = mask is not None
    use_mult = mult is not None

    inputs = [qkv, qkv]
    in_specs = [
        pl.BlockSpec((1, TQ, D3), lambda n, qi: (n, qi, 0)),   # Q view
        pl.BlockSpec((1, T, D3), lambda n, qi: (n, 0, 0)),     # K/V view (resident)
    ]
    if use_mask:
        inputs.append(mask.astype(jnp.float32))
        in_specs.append(pl.BlockSpec((TQ, T), lambda n, qi: (qi, 0)))
    if use_mult:
        inputs.append(mult.astype(jnp.float32))
        in_specs.append(pl.BlockSpec((1, TQ, T), lambda n, qi: (n, qi, 0)))

    out_shape = (
        jax.ShapeDtypeStruct((N, T, D), jnp.bfloat16),
        jax.ShapeDtypeStruct((N, H, T, T), weights_dtype),
    )
    out_specs = (
        pl.BlockSpec((1, TQ, D), lambda n, qi: (n, qi, 0)),
        pl.BlockSpec((1, H, TQ, T), lambda n, qi: (n, 0, qi, 0)),
    )

    w_bytes = N * H * T * T * jnp.dtype(weights_dtype).itemsize
    aux_bytes = (T * T * 4 if use_mask else 0) + (N * T * T * 4 if use_mult else 0)
    cost = pl.CostEstimate(
        flops=4 * N * T * T * D,                    # QK^T + PV
        transcendentals=N * H * T * T,              # exp
        bytes_accessed=int(2 * N * T * D3 * 2 + N * T * D * 2 + w_bytes + aux_bytes),
    )

    kernel = functools.partial(_mha_kernel, num_heads=H, head_dim=hd,
                               embed_dim=D, use_mask=use_mask, use_mult=use_mult)
    return pl.pallas_call(
        kernel,
        out_shape=out_shape,
        grid=grid,
        in_specs=in_specs,
        out_specs=out_specs,
        compiler_params=_compiler_params(("parallel", "parallel")),
        cost_estimate=cost,
    )(*inputs)


# ---------------------------------------------------------------------------
# Module wrapper
# ---------------------------------------------------------------------------

def init_params(key, embed_dim):
    """nn.Linear-shaped params (uniform +/- 1/sqrt(fan_in))."""
    k1, k2, k3, k4 = jax.random.split(key, 4)
    bound = 1.0 / math.sqrt(embed_dim)
    return {
        "w_in": jax.random.uniform(k1, (3 * embed_dim, embed_dim),
                                   minval=-bound, maxval=bound, dtype=jnp.float32),
        "b_in": jax.random.uniform(k2, (3 * embed_dim,),
                                   minval=-bound, maxval=bound, dtype=jnp.float32),
        "w_out": jax.random.uniform(k3, (embed_dim, embed_dim),
                                    minval=-bound, maxval=bound, dtype=jnp.float32),
        "b_out": jax.random.uniform(k4, (embed_dim,),
                                    minval=-bound, maxval=bound, dtype=jnp.float32),
    }


def multihead_attention_forward(x, params, num_heads,
                                attn_mask=None, attn_multiplier=None):
    """
    x: (T, N, D).  attn_mask: optional (T, T) added to pre-softmax logits.
    attn_multiplier: optional (T, T, N), broadcast over heads.
    Returns (out (T, N, D) f32, attn_weights (T, S, N, H) f32).
    """
    T, N, D = x.shape
    H = num_heads
    hd = D // H
    assert hd * H == D
    scale = 1.0 / math.sqrt(hd)

    # (T, N, D) -> (N*T, D) bf16: per-batch-contiguous, cast once for the MXU.
    x_nt = jnp.transpose(x, (1, 0, 2)).reshape(N * T, D).astype(jnp.bfloat16)

    # Fold 1/sqrt(hd) into the q rows of in_proj; single fused (D, 3D) projection.
    scale_vec = jnp.concatenate(
        [jnp.full((D,), scale, jnp.float32), jnp.ones((2 * D,), jnp.float32)])
    w_in_t = (params["w_in"] * scale_vec[:, None]).T.astype(jnp.bfloat16)   # (D, 3D)
    b_in = params["b_in"] * scale_vec

    qkv = pallas_linear(x_nt, w_in_t, b_in,
                        out_dtype=jnp.bfloat16).reshape(N, T, 3 * D)

    mult = None
    if attn_multiplier is not None:
        mult = jnp.transpose(attn_multiplier.astype(jnp.float32), (2, 0, 1))  # (N,T,T)

    o, w_b = pallas_mha_attention(qkv, attn_mask, mult, num_heads=H, embed_dim=D)

    # out_proj on the lane-dense (N*T, D) attention output (already bf16).
    w_out_t = params["w_out"].T.astype(jnp.bfloat16)
    out = pallas_linear(o.reshape(N * T, D), w_out_t, params["b_out"],
                        out_dtype=jnp.float32).reshape(N, T, D)
    out = jnp.transpose(out, (1, 0, 2))                      # (T, N, D)

    # (N, H, T, S) -> (T, S, N, H) to match the PyTorch module's return layout.
    # TODO(synk): the full weights writeback + transpose dominates HBM for long T;
    # it should be made optional (kept to match module semantics).
    attn_weights = jnp.transpose(w_b, (2, 3, 0, 1))
    return out, attn_weights


# ---------------------------------------------------------------------------
# Pure-JAX f32 reference (mirrors the PyTorch forward math) for verification
# ---------------------------------------------------------------------------

def reference_forward(x, params, num_heads, attn_mask=None, attn_multiplier=None):
    T, N, D = x.shape
    H = num_heads
    hd = D // H
    qkv = x @ params["w_in"].T + params["b_in"]
    q, k, v = [a.reshape(T, N, H, hd) for a in jnp.split(qkv, 3, axis=-1)]
    logits = jnp.einsum("tbhd,sbhd->tsbh", q, k) / math.sqrt(hd)
    if attn_mask is not None:
        logits = logits + attn_mask[..., None, None]
    w = jax.nn.softmax(logits, axis=1)
    if attn_multiplier is not None:
        w = w * attn_multiplier[..., None]
        w = w / w.sum(1, keepdims=True)
    attn = jnp.einsum("tsbh,sbhd->tbhd", w, v).reshape(T, N, D)
    out = attn @ params["w_out"].T + params["b_out"]
    return out, w


# ---------------------------------------------------------------------------

if __name__ == "__main__":
    T, N, D, H = 8, 2, 32, 4

    key = jax.random.PRNGKey(0)
    kx, kp, ku = jax.random.split(key, 3)

    x = jax.random.normal(kx, (T, N, D), dtype=jnp.float32)
    params = init_params(kp, D)

    attn_mask = jnp.where(jnp.triu(jnp.ones((T, T), jnp.bool_), k=1),
                          -1e9, 0.0).astype(jnp.float32)
    attn_multiplier = jax.random.uniform(ku, (T, T, N), minval=0.5, maxval=1.5,
                                         dtype=jnp.float32)

    # Case 1: no mask, no multiplier
    out1, w1 = multihead_attention_forward(x, params, H)
    jax.block_until_ready((out1, w1))
    # Case 2: mask + multiplier
    out2, w2 = multihead_attention_forward(x, params, H,
                                           attn_mask=attn_mask,
                                           attn_multiplier=attn_multiplier)
    jax.block_until_ready((out2, w2))

    ref_out1, ref_w1 = reference_forward(x, params, H)
    ref_out2, ref_w2 = reference_forward(x, params, H,
                                         attn_mask=attn_mask,
                                         attn_multiplier=attn_multiplier)

    # Tolerances account for bf16 MXU inputs (f32 accumulation).
    assert np.allclose(np.asarray(out1), np.asarray(ref_out1), atol=5e-2, rtol=5e-2)
    assert np.allclose(np.asarray(w1), np.asarray(ref_w1), atol=2e-2, rtol=5e-2)
    assert np.allclose(np.asarray(out2), np.asarray(ref_out2), atol=5e-2, rtol=5e-2)
    assert np.allclose(np.asarray(w2), np.asarray(ref_w2), atol=2e-2, rtol=5e-2)

    print("KERNEL_OK")
</pallas_src>

<mosaic_0001>
module attributes {stable_mosaic.version = 11 : i64} {
  func.func @_linear_kernel(%arg0: i32, %arg1: i32, %arg2: i32, %arg3: memref<16x32xbf16, #tpu.memory_space<vmem>>, %arg4: memref<32x96xbf16, #tpu.memory_space<vmem>>, %arg5: memref<1x96xf32, #tpu.memory_space<vmem>>, %arg6: memref<16x96xbf16, #tpu.memory_space<vmem>>, %arg7: memref<16x96xf32, #tpu.memory_space<vmem>>) attributes {dimension_semantics = [#tpu.dimension_semantics<parallel>, #tpu.dimension_semantics<parallel>, #tpu.dimension_semantics<arbitrary>], iteration_bounds = array<i64: 1, 1, 1>, scalar_prefetch = 0 : i64, scratch_operands = 1 : i64, tpu.core_type = #tpu.core_type<tc>, window_params = [{transform_indices = @transform_0, window_bounds = array<i64: 16, 32>}, {transform_indices = @transform_1, window_bounds = array<i64: 32, 96>}, {transform_indices = @transform_2, window_bounds = array<i64: 1, 96>}, {transform_indices = @transform_3, window_bounds = array<i64: 16, 96>}]} {
    %c0_i32 = arith.constant 0 : i32
    %0 = arith.cmpi eq, %arg2, %c0_i32 : i32
    %1 = arith.extui %0 : i1 to i32
    %c0_i32_0 = arith.constant 0 : i32
    %2 = arith.cmpi ne, %1, %c0_i32_0 : i32
    scf.if %2 {
      %cst_10 = arith.constant 0.000000e+00 : f32
      %12 = vector.broadcast %cst_10 : f32 to vector<16x96xf32>
      %c0_11 = arith.constant 0 : index
      %c0_12 = arith.constant 0 : index
      %13 = vector.load %arg7[%c0_11, %c0_12] : memref<16x96xf32, #tpu.memory_space<vmem>>, vector<16x96xf32>
      tpu.vector_store %arg7[%c0_11, %c0_12], %12 {strides = array<i32>} : memref<16x96xf32, #tpu.memory_space<vmem>>, vector<16x96xf32>,
    } else {
    }
    %c0 = arith.constant 0 : index
    %c0_1 = arith.constant 0 : index
    %3 = vector.load %arg7[%c0, %c0_1] : memref<16x96xf32, #tpu.memory_space<vmem>>, vector<16x96xf32>
    %c0_2 = arith.constant 0 : index
    %c0_3 = arith.constant 0 : index
    %4 = vector.load %arg3[%c0_2, %c0_3] : memref<16x32xbf16, #tpu.memory_space<vmem>>, vector<16x32xbf16>
    %c0_4 = arith.constant 0 : index
    %c0_5 = arith.constant 0 : index
    %5 = vector.load %arg4[%c0_4, %c0_5] : memref<32x96xbf16, #tpu.memory_space<vmem>>, vector<32x96xbf16>
    %cst = arith.constant dense<0.000000e+00> : vector<16x96xf32>
    %6 = tpu.matmul %4, %5, %cst {dimension_numbers = #tpu.dot_dimension_numbers<[1], [0], [0], [1], [0, 0, 1, 1], [], []>} : vector<16x32xbf16>, vector<32x96xbf16>, vector<16x96xf32> -> vector<16x96xf32>
    %7 = arith.addf %3, %6 : vector<16x96xf32>
    %c0_6 = arith.constant 0 : index
    %c0_7 = arith.constant 0 : index
    %8 = vector.load %arg7[%c0_6, %c0_7] : memref<16x96xf32, #tpu.memory_space<vmem>>, vector<16x96xf32>
    tpu.vector_store %arg7[%c0_6, %c0_7], %7 {strides = array<i32>} : memref<16x96xf32, #tpu.memory_space<vmem>>, vector<16x96xf32>,
    %c0_i32_8 = arith.constant 0 : i32
    %9 = arith.cmpi eq, %arg2, %c0_i32_8 : i32
    %10 = arith.extui %9 : i1 to i32
    %c0_i32_9 = arith.constant 0 : i32
    %11 = arith.cmpi ne, %10, %c0_i32_9 : i32
    scf.if %11 {
      %c0_10 = arith.constant 0 : index
      %c0_11 = arith.constant 0 : index
      %12 = vector.load %arg7[%c0_10, %c0_11] : memref<16x96xf32, #tpu.memory_space<vmem>>, vector<16x96xf32>
      %c0_12 = arith.constant 0 : index
      %c0_13 = arith.constant 0 : index
      %13 = vector.load %arg5[%c0_12, %c0_13] : memref<1x96xf32, #tpu.memory_space<vmem>>, vector<1x96xf32>
      %14 = vector.broadcast %13 : vector<1x96xf32> to vector<16x96xf32>
      %15 = arith.addf %12, %14 : vector<16x96xf32>
      %16 = arith.truncf %15 : vector<16x96xf32> to vector<16x96xbf16>
      %c0_14 = arith.constant 0 : index
      %c0_15 = arith.constant 0 : index
      %17 = vector.load %arg6[%c0_14, %c0_15] : memref<16x96xbf16, #tpu.memory_space<vmem>>, vector<16x96xbf16>
      tpu.vector_store %arg6[%c0_14, %c0_15], %16 {strides = array<i32>} : memref<16x96xbf16, #tpu.memory_space<vmem>>, vector<16x96xbf16>,
    } else {
    }
    return
  }
  func.func @transform_0(%arg0: i32, %arg1: i32, %arg2: i32) -> (i32, i32) {
    %c0_i32 = arith.constant 0 : i32
    return %arg0, %arg2 : i32, i32
  }
  func.func @transform_1(%arg0: i32, %arg1: i32, %arg2: i32) -> (i32, i32) {
    %c0_i32 = arith.constant 0 : i32
    return %arg2, %arg1 : i32, i32
  }
  func.func @transform_2(%arg0: i32, %arg1: i32, %arg2: i32) -> (i32, i32) {
    %c0_i32 = arith.constant 0 : i32
    %c0_i32_0 = arith.constant 0 : i32
    return %c0_i32, %arg1 : i32, i32
  }
  func.func @transform_3(%arg0: i32, %arg1: i32, %arg2: i32) -> (i32, i32) {
    %c0_i32 = arith.constant 0 : i32
    return %arg0, %arg1 : i32, i32
  }
}

</mosaic_0001>

<llo_original>
// kernel: tpu_custom_call.1
$region0: #{tpu_custom_call.1}
  #allocation0 [shape = 'u32[]', space=smem, size = 0x4, offset = 0x4, fixed_abs, tag = 'smem constant byte address 0x4 - core index']
  #allocation1 [shape = 'u32[144,128]{1,0:T(1,128)}', space=vmem, size = 0x12000, scoped, tag = 'internal scratch']
  #allocation2 [shape = 'f32[16,96]{1,0:T(8,128)}', space=vmem, size = 0x2000, scoped, tag = 'scratch operand']
  %s0 = inlined_call_operand.hbm [shape: bf16[16,32], index: 0, kind: input, shape index: {}]
  %s1 = inlined_call_operand.hbm [shape: bf16[32,96], index: 1, kind: input, shape index: {}]
  %s2 = inlined_call_operand.vmem [shape: f32[1,96], index: 2, kind: input, shape index: {}]
  %s3 = inlined_call_operand.hbm [shape: bf16[16,96], index: 3, kind: output, shape index: {}]
  %s4 = sld [smem:[#allocation0]]
  $region38: #{tpu_custom_call.1} parent=0
    _
  %s6 = ssub.s32 1, %s4
  %s7 = scalar_select 0, %s6, %s4
  $region1: #{tpu_custom_call.1} parent=0
    #allocation3 [shape = 'u8[4096]{0}', space=vmem, size = 0x1000, scoped, tag = 'input window, operand 0, single buffered']
    #allocation4 [shape = 's32[1]{0}', space=sflag, size = 0x4, scoped, tag = 'scoped memory for tpu_custom_call.1']
    #allocation5 [shape = 's32[1]{0}', space=sflag, size = 0x4, scoped, tag = 'scoped memory for tpu_custom_call.1']
    #allocation6 [shape = 'u8[8192]{0}', space=vmem, size = 0x2000, scoped, tag = 'input window, operand 1, single buffered']
    #allocation7 [shape = 's32[1]{0}', space=sflag, size = 0x4, scoped, tag = 'scoped memory for tpu_custom_call.1']
    #allocation8 [shape = 'u8[4096]{0}', space=vmem, size = 0x1000, scoped, tag = 'output window, operand 0, single buffered']
    %8 = vsyncpa [#allocation4], 0
    %9 = vsyncpa [#allocation7], 0
    %10 = vsyncpa [#allocation5], 0
    // Predicated region
    $region2: #{tpu_custom_call.1} parent=1 // pred_check
      _
    $region3: #{tpu_custom_call.1} parent=1 // pred_check_branch
      %12 = sbr.rel (0) target = $region5
    $region4: #{tpu_custom_call.1} parent=1 // pred_region
      %s14 = ssub.s32 128, 128
      %15 = vsyncadd [#allocation4], %s14
      %s16 = sshll.u32 [#allocation3], 4
      %s17 = int_to_ptr.vmem [resolvable:$true] %s16
      %22 = dma.hbm_to_vmem [thread:$0]  %s0, 128, %s17, [#allocation4], 64, 64, 4
    $region5: #{tpu_custom_call.1} parent=1 // pred_fallthru
      _
    // Predicated region
    $region6: #{tpu_custom_call.1} parent=1 // pred_check
      _
    $region7: #{tpu_custom_call.1} parent=1 // pred_check_branch
      %24 = sbr.rel (0) target = $region9
    $region8: #{tpu_custom_call.1} parent=1 // pred_region
      %s26 = ssub.s32 256, 256
      %27 = vsyncadd [#allocation7], %s26
      %s28 = sshll.u32 [#allocation6], 4
      %s29 = int_to_ptr.vmem [resolvable:$true] %s28
      %34 = dma.hbm_to_vmem [thread:$0]  %s1, 256, %s29, [#allocation7], 64, 64, 4
    $region9: #{tpu_custom_call.1} parent=1 // pred_fallthru
      _
    // Predicated region
    $region10: #{tpu_custom_call.1} parent=1 // pred_check
      _
    $region11: #{tpu_custom_call.1} parent=1 // pred_check_branch
      %36 = sbr.rel (0) target = $region13
    $region12: #{tpu_custom_call.1} parent=1 // pred_region
      _
    $region13: #{tpu_custom_call.1} parent=1 // pred_fallthru
      _
    // Predicated region
    $region14: #{tpu_custom_call.1} parent=1 // pred_check
      _
    $region15: #{tpu_custom_call.1} parent=1 // pred_check_branch
      %38 = sbr.rel (0) target = $region17
    $region16: #{tpu_custom_call.1} parent=1 // pred_region
      %39 = dma.done [#allocation4], 128
    $region17: #{tpu_custom_call.1} parent=1 // pred_fallthru
      _
    // Predicated region
    $region18: #{tpu_custom_call.1} parent=1 // pred_check
      _
    $region19: #{tpu_custom_call.1} parent=1 // pred_check_branch
      %41 = sbr.rel (0) target = $region21
    $region20: #{tpu_custom_call.1} parent=1 // pred_region
      %42 = dma.done [#allocation7], 256
    $region21: #{tpu_custom_call.1} parent=1 // pred_fallthru
      _
    %p44 = scmp.eq.s32.totalorder 0, 0
    // Predicated region
    $region22: #{tpu_custom_call.1} parent=1 // pred_check
      %p45 = pneg %p44
    $region23: #{tpu_custom_call.1} parent=1 // pred_check_branch
      %47 = sbr.rel (%p45) target = $region25
    $region24: #{tpu_custom_call.1} parent=1 // pred_region
      %vm48 = vcmask 785408
      %49 = vst.msk [vmem:[#allocation2] sm:$0xff] %vm48, 0.0
      %50 = vst.msk [vmem:[#allocation2 + $0x8] sm:$0xff] %vm48, 0.0
    $region25: #{tpu_custom_call.1} parent=1 // pred_fallthru
      _
    %v51 = vld [vmem:[#allocation2] sm:$0xff]
    %v52 = vld [vmem:[#allocation2 + $0x8] sm:$0xff]
    %v53 = vld [vmem:[#allocation3] sm:$0xf]
    %v54 = vld [vmem:[#allocation3 + $0x4] sm:$0xf]
    %v55 = vld [vmem:[#allocation6] sm:$0xf]
    %v56 = vld [vmem:[#allocation6 + $0x4] sm:$0xf]
    %v57 = vld [vmem:[#allocation6 + $0x8] sm:$0xf]
    %v58 = vld [vmem:[#allocation6 + $0xc] sm:$0xf]
    %v61 = vunpack.c.l.b16 %v53
    %v62 = vunpack.c.l.b16 %v54
    %v63 = vpack.c.b16 %v62, %v61
    %v68 = vunpack.c.l.b16 %v55
    %v69 = vunpack.c.l.b16 %v56
    %v70 = vunpack.c.l.b16 %v57
    %v71 = vunpack.c.l.b16 %v58
    %v72 = vpack.c.b16 %v69, %v68
    %v73 = vpack.c.b16 %v71, %v70
    %vm76 = vcmask 261120
    %v78 = vsel %vm76, %v63, 0
    %80 = vmatprep.subr.bf16.mxu0 0
    %81 = vmatpush1.bf16.msra.mxu0 %v72
    %82 = vmatprep.subr.bf16.mxu0 0
    %83 = vmatpush1.bf16.msra.mxu0 %v73
    %84 = vmatprep.subr.bf16.mxu0 0
    %85 = vmatpush1.bf16.msra.mxu0 0
    %86 = vmatprep.subr.bf16.mxu0 0
    %87 = vmatpush1.bf16.msra.mxu0 0
    %88 = vmatprep.subr.bf16.mxu0 0
    %89 = vmatpush1.bf16.msra.mxu0 0
    %90 = vmatprep.subr.bf16.mxu0 0
    %91 = vmatpush1.bf16.msra.mxu0 0
    %92 = vmatprep.subr.bf16.mxu0 0
    %93 = vmatpush1.bf16.msra.mxu0 0
    %94 = vmatprep.subr.bf16.mxu0 0
    %95 = vmatpush1.bf16.msra.mxu0 0
    %96 = vmatprep.subr.bf16.mxu0 0
    %97 = vmatpush1.bf16.msra.mxu0 0
    %98 = vmatprep.subr.bf16.mxu0 0
    %99 = vmatpush1.bf16.msra.mxu0 0
    %100 = vmatprep.subr.bf16.mxu0 0
    %101 = vmatpush1.bf16.msra.mxu0 0
    %102 = vmatprep.subr.bf16.mxu0 0
    %103 = vmatpush1.bf16.msra.mxu0 0
    %104 = vmatprep.subr.bf16.mxu0 0
    %105 = vmatpush1.bf16.msra.mxu0 0
    %106 = vmatprep.subr.bf16.mxu0 0
    %107 = vmatpush1.bf16.msra.mxu0 0
    %108 = vmatprep.subr.bf16.mxu0 0
    %109 = vmatpush1.bf16.msra.mxu0 0
    %110 = vmatprep.subr.bf16.mxu0 0
    %111 = vmatpush1.bf16.msra.mxu0 0
    %112 = vmatprep.mubr.bf16.mxu0 0
    %113 = vmatmul.mubr.bf16.gmra.mrb[0].mxu0 %v78
    %v114 = vpop.f32.mrb[0].mxu0
    %v115 = vadd.f32 0.0, %v114
    %v116 = vpop.f32.mrb[0].mxu0
    %v117 = vpop.f32.mrb[0].mxu0
    %v118 = vadd.f32 0.0, %v117
    %v119 = vpop.f32.mrb[0].mxu0
    %120 = vdwg.mxu0
    %v121 = vadd.f32 %v51, %v115
    %v122 = vadd.f32 %v52, %v118
    %vm123 = vcmask 785408
    %124 = vst.msk [vmem:[#allocation2] sm:$0xff] %vm123, %v121
    %125 = vst.msk [vmem:[#allocation2 + $0x8] sm:$0xff] %vm123, %v122
    // Predicated region
    $region26: #{tpu_custom_call.1} parent=1 // pred_check
      %p126 = pneg %p44
    $region27: #{tpu_custom_call.1} parent=1 // pred_check_branch
      %128 = sbr.rel (%p126) target = $region29
    $region28: #{tpu_custom_call.1} parent=1 // pred_region
      %v129 = vld [vmem:[#allocation2] sm:$0xff]
      %v130 = vld [vmem:[#allocation2 + $0x8] sm:$0xff]
      %v131 = vld [vmem:[%s2] sm:$0x1]
      %v133 = vlaneseq
      %v134 = vshrl.u32 %v133, 7
      %v135 = vsub.s32 0, %v134
      %v136 = vrot.slane %v131, %v135
      %v138 = vadd.f32 %v129, %v136
      %v139 = vadd.f32 %v130, %v136
      %v140 = vpack.c.bf16 %v139, %v138
      %v142 = vunpack.c.l.b16 %v140
      %v143 = vunpack.c.h.b16 %v140
      %v144 = vpack.c.b16 %v142, %v142
      %v145 = vpack.c.b16 %v143, %v143
      %vm148 = vcmask 781312
      %149 = vst.msk [vmem:[#allocation8] sm:$0xf] %vm148, %v144
      %150 = vst.msk [vmem:[#allocation8 + $0x4] sm:$0xf] %vm148, %v145
    $region29: #{tpu_custom_call.1} parent=1 // pred_fallthru
      _
    // Predicated region
    $region30: #{tpu_custom_call.1} parent=1 // pred_check
      _
    $region31: #{tpu_custom_call.1} parent=1 // pred_check_branch
      %152 = sbr.rel (0) target = $region33
    $region32: #{tpu_custom_call.1} parent=1 // pred_region
      %s154 = ssub.s32 128, 128
      %155 = vsyncadd [#allocation5], %s154
      %s156 = sshll.u32 [#allocation8], 4
      %s157 = int_to_ptr.vmem [resolvable:$true] %s156
      %162 = dma.vmem_to_hbm [thread:$0]  %s157, 128, %s3, [#allocation5], 64, 64, 4
    $region33: #{tpu_custom_call.1} parent=1 // pred_fallthru
      _
    // Predicated region
    $region34: #{tpu_custom_call.1} parent=1 // pred_check
      _
    $region35: #{tpu_custom_call.1} parent=1 // pred_check_branch
      %164 = sbr.rel (0) target = $region37
    $region36: #{tpu_custom_call.1} parent=1 // pred_region
      %165 = dma.done [#allocation5], 128
    $region37: #{tpu_custom_call.1} parent=1 // pred_fallthru
      _
    %166 = vsyncpa [#allocation4], 1
    %167 = vsyncpa [#allocation7], 1
    %168 = vsyncpa [#allocation5], 1

</llo_original>
